<compile_context>
chip_gen: v7x
topology: tpu7x:2x2x1
jax: 0.10.0
libtpu: 0.0.40
codegen_flags: <defaults>
</compile_context>

<pallas_src>
import functools

import jax
import jax.numpy as jnp
from jax import lax
from jax.experimental import pallas as pl
from jax.experimental.pallas import tpu as pltpu

_LANE = 128


def _round_up(x: int, m: int) -> int:
    return ((x + m - 1) // m) * m


def _make_cc_kernel(n_elems: int, rows_total: int, tile_rows: int, lane: int,
                    needs_mask: bool):
    n_chunks = tile_rows // 8
    inv_n = 1.0 / float(n_elems)  # exact in double at trace time

    def kernel(s_ref, g_ref, out_ref, a_s, a_g, a_sg, a_ss, a_gg):
        i = pl.program_id(0)

        @pl.when(i == 0)
        def _init():
            a_s[...] = jnp.zeros_like(a_s)
            a_g[...] = jnp.zeros_like(a_g)
            a_sg[...] = jnp.zeros_like(a_sg)
            a_ss[...] = jnp.zeros_like(a_ss)
            a_gg[...] = jnp.zeros_like(a_gg)

        def body(c, carry):
            c_s, c_g, c_sg, c_ss, c_gg = carry
            r0 = pl.multiple_of(c * 8, 8)
            s = s_ref[pl.ds(r0, 8), :].astype(jnp.float32)
            g = g_ref[pl.ds(r0, 8), :].astype(jnp.float32)
            if needs_mask:
                # Zero out rows that fall past the true row count (edge block
                # contents beyond the array bounds are undefined).
                row = (i * tile_rows + r0) + lax.broadcasted_iota(
                    jnp.int32, (8, lane), 0)
                valid = row < rows_total
                s = jnp.where(valid, s, 0.0)
                g = jnp.where(valid, g, 0.0)
            return (c_s + s, c_g + g, c_sg + s * g, c_ss + s * s, c_gg + g * g)

        init = (a_s[...], a_g[...], a_sg[...], a_ss[...], a_gg[...])
        unroll = n_chunks if n_chunks <= 8 else 8
        acc = lax.fori_loop(0, n_chunks, body, init, unroll=unroll)
        a_s[...] = acc[0]
        a_g[...] = acc[1]
        a_sg[...] = acc[2]
        a_ss[...] = acc[3]
        a_gg[...] = acc[4]

        @pl.when(i == pl.num_programs(0) - 1)
        def _finalize():
            inv = jnp.float32(inv_n)
            s_sum = jnp.sum(a_s[...])
            g_sum = jnp.sum(a_g[...])
            sg_sum = jnp.sum(a_sg[...])
            ss_sum = jnp.sum(a_ss[...])
            gg_sum = jnp.sum(a_gg[...])
            num = sg_sum - s_sum * g_sum * inv
            var_s = jnp.maximum(ss_sum - s_sum * s_sum * inv, 0.0)
            var_g = jnp.maximum(gg_sum - g_sum * g_sum * inv, 0.0)
            out_ref[0, 0] = num / (jnp.sqrt(var_s) * jnp.sqrt(var_g))

    return kernel


def _as_2d(x):
    """2-D slab view without copying HBM data (contiguous reshape is free).

    Preferred: lane-dense (N/128, 128).  Otherwise collapse leading dims and
    keep the original last dim as the lane dim.  Only a pathological 1-D,
    non-lane-divisible input falls back to a tail pad (one extra copy).
    """
    n = x.size
    if n % _LANE == 0:
        return x.reshape(n // _LANE, _LANE)
    if x.ndim >= 2 and x.shape[-1] <= 4096:
        return x.reshape(-1, x.shape[-1])
    pad = (-n) % _LANE
    return jnp.pad(x.reshape(-1), (0, pad)).reshape(-1, _LANE)


@functools.partial(jax.jit, static_argnames=("tile_rows",))
def cc_loss(saliency_map, gtruth, tile_rows: int = 1024):
    """Pearson CC between two tensors of identical shape (any rank)."""
    assert saliency_map.shape == gtruth.shape
    n_elems = saliency_map.size

    # Native dtype all the way to the kernel (cast to f32 happens in-kernel).
    s2 = _as_2d(saliency_map)
    g2 = _as_2d(gtruth)
    rows, lane = s2.shape

    # Effective tile: multiple of 8, no larger than (rounded-up) row count.
    tr = min(_round_up(tile_rows, 8), _round_up(rows, 8))
    grid_len = pl.cdiv(rows, tr)
    needs_mask = (rows % tr) != 0

    out = pl.pallas_call(
        _make_cc_kernel(n_elems, rows, tr, lane, needs_mask),
        out_shape=jax.ShapeDtypeStruct((1, 1), jnp.float32),
        grid_spec=pltpu.PrefetchScalarGridSpec(
            num_scalar_prefetch=0,
            grid=(grid_len,),
            in_specs=[
                pl.BlockSpec((tr, lane), lambda i: (i, 0)),
                pl.BlockSpec((tr, lane), lambda i: (i, 0)),
            ],
            out_specs=pl.BlockSpec(memory_space=pltpu.SMEM),
            scratch_shapes=[pltpu.VMEM((8, lane), jnp.float32)] * 5,
        ),
        compiler_params=pltpu.CompilerParams(
            dimension_semantics=("arbitrary",),
        ),
    )(s2, g2)
    return out[0, 0]


def cc_loss_ref(saliency_map, gtruth):
    s = saliency_map - jnp.mean(saliency_map)
    g = gtruth - jnp.mean(gtruth)
    return jnp.sum(s * g) / (jnp.sqrt(jnp.sum(s * s)) * jnp.sqrt(jnp.sum(g * g)))


if __name__ == "__main__":
    key = jax.random.PRNGKey(0)
    k1, k2, k3, k4 = jax.random.split(key, 4)

    # Test 1: NCHW shape as the PyTorch module would receive (lane-dense path).
    shape = (2, 4, 16, 16)
    saliency = jax.random.uniform(k1, shape, dtype=jnp.float32)
    gtruth = jax.random.uniform(k2, shape, dtype=jnp.float32)
    result = jax.block_until_ready(cc_loss(saliency, gtruth))
    ref = cc_loss_ref(saliency, gtruth)
    assert jnp.allclose(result, ref, atol=5e-5, rtol=1e-4), (result, ref)

    # Test 2: row count not a multiple of the tile -> exercises the in-kernel
    # edge-tile row mask (no wrapper padding involved).
    shape2 = (3, 5, 16, 16)
    s_b = jax.random.uniform(k3, shape2, dtype=jnp.float32)
    g_b = jax.random.uniform(k4, shape2, dtype=jnp.float32)
    result2 = jax.block_until_ready(cc_loss(s_b, g_b, tile_rows=8))
    ref2 = cc_loss_ref(s_b, g_b)
    assert jnp.allclose(result2, ref2, atol=5e-5, rtol=1e-4), (result2, ref2)

    print("KERNEL_OK")
</pallas_src>

<mosaic_0001>
module attributes {stable_mosaic.version = 11 : i64} {
  func.func @kernel(%arg0: i32, %arg1: memref<16x128xf32, #tpu.memory_space<vmem>>, %arg2: memref<16x128xf32, #tpu.memory_space<vmem>>, %arg3: memref<1x1xf32, #tpu.memory_space<smem>>, %arg4: memref<8x128xf32, #tpu.memory_space<vmem>>, %arg5: memref<8x128xf32, #tpu.memory_space<vmem>>, %arg6: memref<8x128xf32, #tpu.memory_space<vmem>>, %arg7: memref<8x128xf32, #tpu.memory_space<vmem>>, %arg8: memref<8x128xf32, #tpu.memory_space<vmem>>) attributes {dimension_semantics = [#tpu.dimension_semantics<arbitrary>], iteration_bounds = array<i64: 1>, scalar_prefetch = 0 : i64, scratch_operands = 5 : i64, tpu.core_type = #tpu.core_type<tc>, window_params = [{transform_indices = @transform_0, window_bounds = array<i64: 16, 128>}, {transform_indices = @transform_1, window_bounds = array<i64: 16, 128>}, {transform_indices = @transform_2, window_bounds = array<i64: 1, 1>}]} {
    %c0_i32 = arith.constant 0 : i32
    %0 = arith.cmpi eq, %arg0, %c0_i32 : i32
    %1 = arith.extui %0 : i1 to i32
    %c0_i32_0 = arith.constant 0 : i32
    %2 = arith.cmpi ne, %1, %c0_i32_0 : i32
    scf.if %2 {
      %cst = arith.constant 0.000000e+00 : f32
      %44 = vector.broadcast %cst : f32 to vector<8x128xf32>
      %c0_28 = arith.constant 0 : index
      %c0_29 = arith.constant 0 : index
      %45 = vector.load %arg4[%c0_28, %c0_29] : memref<8x128xf32, #tpu.memory_space<vmem>>, vector<8x128xf32>
      tpu.vector_store %arg4[%c0_28, %c0_29], %44 {strides = array<i32>} : memref<8x128xf32, #tpu.memory_space<vmem>>, vector<8x128xf32>,
      %cst_30 = arith.constant 0.000000e+00 : f32
      %46 = vector.broadcast %cst_30 : f32 to vector<8x128xf32>
      %c0_31 = arith.constant 0 : index
      %c0_32 = arith.constant 0 : index
      %47 = vector.load %arg5[%c0_31, %c0_32] : memref<8x128xf32, #tpu.memory_space<vmem>>, vector<8x128xf32>
      tpu.vector_store %arg5[%c0_31, %c0_32], %46 {strides = array<i32>} : memref<8x128xf32, #tpu.memory_space<vmem>>, vector<8x128xf32>,
      %cst_33 = arith.constant 0.000000e+00 : f32
      %48 = vector.broadcast %cst_33 : f32 to vector<8x128xf32>
      %c0_34 = arith.constant 0 : index
      %c0_35 = arith.constant 0 : index
      %49 = vector.load %arg6[%c0_34, %c0_35] : memref<8x128xf32, #tpu.memory_space<vmem>>, vector<8x128xf32>
      tpu.vector_store %arg6[%c0_34, %c0_35], %48 {strides = array<i32>} : memref<8x128xf32, #tpu.memory_space<vmem>>, vector<8x128xf32>,
      %cst_36 = arith.constant 0.000000e+00 : f32
      %50 = vector.broadcast %cst_36 : f32 to vector<8x128xf32>
      %c0_37 = arith.constant 0 : index
      %c0_38 = arith.constant 0 : index
      %51 = vector.load %arg7[%c0_37, %c0_38] : memref<8x128xf32, #tpu.memory_space<vmem>>, vector<8x128xf32>
      tpu.vector_store %arg7[%c0_37, %c0_38], %50 {strides = array<i32>} : memref<8x128xf32, #tpu.memory_space<vmem>>, vector<8x128xf32>,
      %cst_39 = arith.constant 0.000000e+00 : f32
      %52 = vector.broadcast %cst_39 : f32 to vector<8x128xf32>
      %c0_40 = arith.constant 0 : index
      %c0_41 = arith.constant 0 : index
      %53 = vector.load %arg8[%c0_40, %c0_41] : memref<8x128xf32, #tpu.memory_space<vmem>>, vector<8x128xf32>
      tpu.vector_store %arg8[%c0_40, %c0_41], %52 {strides = array<i32>} : memref<8x128xf32, #tpu.memory_space<vmem>>, vector<8x128xf32>,
    } else {
    }
    %c0 = arith.constant 0 : index
    %c0_1 = arith.constant 0 : index
    %3 = vector.load %arg4[%c0, %c0_1] : memref<8x128xf32, #tpu.memory_space<vmem>>, vector<8x128xf32>
    %c0_2 = arith.constant 0 : index
    %c0_3 = arith.constant 0 : index
    %4 = vector.load %arg5[%c0_2, %c0_3] : memref<8x128xf32, #tpu.memory_space<vmem>>, vector<8x128xf32>
    %c0_4 = arith.constant 0 : index
    %c0_5 = arith.constant 0 : index
    %5 = vector.load %arg6[%c0_4, %c0_5] : memref<8x128xf32, #tpu.memory_space<vmem>>, vector<8x128xf32>
    %c0_6 = arith.constant 0 : index
    %c0_7 = arith.constant 0 : index
    %6 = vector.load %arg7[%c0_6, %c0_7] : memref<8x128xf32, #tpu.memory_space<vmem>>, vector<8x128xf32>
    %c0_8 = arith.constant 0 : index
    %c0_9 = arith.constant 0 : index
    %7 = vector.load %arg8[%c0_8, %c0_9] : memref<8x128xf32, #tpu.memory_space<vmem>>, vector<8x128xf32>
    %c0_i32_10 = arith.constant 0 : i32
    %c8_i32 = arith.constant 8 : i32
    %8 = arith.muli %c0_i32_10, %c8_i32 : i32
    %9 = tpu.assume_multiple %8, 8 : i32
    %10 = arith.index_cast %9 : i32 to index
    %c0_11 = arith.constant 0 : index
    %11 = vector.load %arg1[%10, %c0_11] : memref<16x128xf32, #tpu.memory_space<vmem>>, vector<8x128xf32>
    %12 = arith.index_cast %9 : i32 to index
    %c0_12 = arith.constant 0 : index
    %13 = vector.load %arg2[%12, %c0_12] : memref<16x128xf32, #tpu.memory_space<vmem>>, vector<8x128xf32>
    %14 = arith.addf %3, %11 : vector<8x128xf32>
    %15 = arith.addf %4, %13 : vector<8x128xf32>
    %16 = arith.mulf %11, %13 : vector<8x128xf32>
    %17 = arith.addf %5, %16 : vector<8x128xf32>
    %18 = arith.mulf %11, %11 : vector<8x128xf32>
    %19 = arith.addf %6, %18 : vector<8x128xf32>
    %20 = arith.mulf %13, %13 : vector<8x128xf32>
    %21 = arith.addf %7, %20 : vector<8x128xf32>
    %c1_i32 = arith.constant 1 : i32
    %c8_i32_13 = arith.constant 8 : i32
    %22 = arith.muli %c1_i32, %c8_i32_13 : i32
    %23 = tpu.assume_multiple %22, 8 : i32
    %24 = arith.index_cast %23 : i32 to index
    %c0_14 = arith.constant 0 : index
    %25 = vector.load %arg1[%24, %c0_14] : memref<16x128xf32, #tpu.memory_space<vmem>>, vector<8x128xf32>
    %26 = arith.index_cast %23 : i32 to index
    %c0_15 = arith.constant 0 : index
    %27 = vector.load %arg2[%26, %c0_15] : memref<16x128xf32, #tpu.memory_space<vmem>>, vector<8x128xf32>
    %28 = arith.addf %14, %25 : vector<8x128xf32>
    %29 = arith.addf %15, %27 : vector<8x128xf32>
    %30 = arith.mulf %25, %27 : vector<8x128xf32>
    %31 = arith.addf %17, %30 : vector<8x128xf32>
    %32 = arith.mulf %25, %25 : vector<8x128xf32>
    %33 = arith.addf %19, %32 : vector<8x128xf32>
    %34 = arith.mulf %27, %27 : vector<8x128xf32>
    %35 = arith.addf %21, %34 : vector<8x128xf32>
    %c2_i32 = arith.constant 2 : i32
    %c0_16 = arith.constant 0 : index
    %c0_17 = arith.constant 0 : index
    %36 = vector.load %arg4[%c0_16, %c0_17] : memref<8x128xf32, #tpu.memory_space<vmem>>, vector<8x128xf32>
    tpu.vector_store %arg4[%c0_16, %c0_17], %28 {strides = array<i32>} : memref<8x128xf32, #tpu.memory_space<vmem>>, vector<8x128xf32>,
    %c0_18 = arith.constant 0 : index
    %c0_19 = arith.constant 0 : index
    %37 = vector.load %arg5[%c0_18, %c0_19] : memref<8x128xf32, #tpu.memory_space<vmem>>, vector<8x128xf32>
    tpu.vector_store %arg5[%c0_18, %c0_19], %29 {strides = array<i32>} : memref<8x128xf32, #tpu.memory_space<vmem>>, vector<8x128xf32>,
    %c0_20 = arith.constant 0 : index
    %c0_21 = arith.constant 0 : index
    %38 = vector.load %arg6[%c0_20, %c0_21] : memref<8x128xf32, #tpu.memory_space<vmem>>, vector<8x128xf32>
    tpu.vector_store %arg6[%c0_20, %c0_21], %31 {strides = array<i32>} : memref<8x128xf32, #tpu.memory_space<vmem>>, vector<8x128xf32>,
    %c0_22 = arith.constant 0 : index
    %c0_23 = arith.constant 0 : index
    %39 = vector.load %arg7[%c0_22, %c0_23] : memref<8x128xf32, #tpu.memory_space<vmem>>, vector<8x128xf32>
    tpu.vector_store %arg7[%c0_22, %c0_23], %33 {strides = array<i32>} : memref<8x128xf32, #tpu.memory_space<vmem>>, vector<8x128xf32>,
    %c0_24 = arith.constant 0 : index
    %c0_25 = arith.constant 0 : index
    %40 = vector.load %arg8[%c0_24, %c0_25] : memref<8x128xf32, #tpu.memory_space<vmem>>, vector<8x128xf32>
    tpu.vector_store %arg8[%c0_24, %c0_25], %35 {strides = array<i32>} : memref<8x128xf32, #tpu.memory_space<vmem>>, vector<8x128xf32>,
    %c0_i32_26 = arith.constant 0 : i32
    %41 = arith.cmpi eq, %arg0, %c0_i32_26 : i32
    %42 = arith.extui %41 : i1 to i32
    %c0_i32_27 = arith.constant 0 : i32
    %43 = arith.cmpi ne, %42, %c0_i32_27 : i32
    scf.if %43 {
      %c0_28 = arith.constant 0 : index
      %c0_29 = arith.constant 0 : index
      %44 = vector.load %arg4[%c0_28, %c0_29] : memref<8x128xf32, #tpu.memory_space<vmem>>, vector<8x128xf32>
      %45 = vector.shape_cast %44 : vector<8x128xf32> to vector<1x8x128xf32>
      %cst = arith.constant dense<0.000000e+00> : vector<1xf32>
      %46 = vector.multi_reduction <add>, %45, %cst [1, 2] : vector<1x8x128xf32> to vector<1xf32>
      %47 = vector.shape_cast %46 : vector<1xf32> to vector<1x1x1xf32>
      %48 = vector.extract %47[0, 0, 0] : f32 from vector<1x1x1xf32>
      %c0_30 = arith.constant 0 : index
      %c0_31 = arith.constant 0 : index
      %49 = vector.load %arg5[%c0_30, %c0_31] : memref<8x128xf32, #tpu.memory_space<vmem>>, vector<8x128xf32>
      %50 = vector.shape_cast %49 : vector<8x128xf32> to vector<1x8x128xf32>
      %cst_32 = arith.constant dense<0.000000e+00> : vector<1xf32>
      %51 = vector.multi_reduction <add>, %50, %cst_32 [1, 2] : vector<1x8x128xf32> to vector<1xf32>
      %52 = vector.shape_cast %51 : vector<1xf32> to vector<1x1x1xf32>
      %53 = vector.extract %52[0, 0, 0] : f32 from vector<1x1x1xf32>
      %c0_33 = arith.constant 0 : index
      %c0_34 = arith.constant 0 : index
      %54 = vector.load %arg6[%c0_33, %c0_34] : memref<8x128xf32, #tpu.memory_space<vmem>>, vector<8x128xf32>
      %55 = vector.shape_cast %54 : vector<8x128xf32> to vector<1x8x128xf32>
      %cst_35 = arith.constant dense<0.000000e+00> : vector<1xf32>
      %56 = vector.multi_reduction <add>, %55, %cst_35 [1, 2] : vector<1x8x128xf32> to vector<1xf32>
      %57 = vector.shape_cast %56 : vector<1xf32> to vector<1x1x1xf32>
      %58 = vector.extract %57[0, 0, 0] : f32 from vector<1x1x1xf32>
      %c0_36 = arith.constant 0 : index
      %c0_37 = arith.constant 0 : index
      %59 = vector.load %arg7[%c0_36, %c0_37] : memref<8x128xf32, #tpu.memory_space<vmem>>, vector<8x128xf32>
      %60 = vector.shape_cast %59 : vector<8x128xf32> to vector<1x8x128xf32>
      %cst_38 = arith.constant dense<0.000000e+00> : vector<1xf32>
      %61 = vector.multi_reduction <add>, %60, %cst_38 [1, 2] : vector<1x8x128xf32> to vector<1xf32>
      %62 = vector.shape_cast %61 : vector<1xf32> to vector<1x1x1xf32>
      %63 = vector.extract %62[0, 0, 0] : f32 from vector<1x1x1xf32>
      %c0_39 = arith.constant 0 : index
      %c0_40 = arith.constant 0 : index
      %64 = vector.load %arg8[%c0_39, %c0_40] : memref<8x128xf32, #tpu.memory_space<vmem>>, vector<8x128xf32>
      %65 = vector.shape_cast %64 : vector<8x128xf32> to vector<1x8x128xf32>
      %cst_41 = arith.constant dense<0.000000e+00> : vector<1xf32>
      %66 = vector.multi_reduction <add>, %65, %cst_41 [1, 2] : vector<1x8x128xf32> to vector<1xf32>
      %67 = vector.shape_cast %66 : vector<1xf32> to vector<1x1x1xf32>
      %68 = vector.extract %67[0, 0, 0] : f32 from vector<1x1x1xf32>
      %69 = arith.mulf %48, %53 : f32
      %cst_42 = arith.constant 4.8828125E-4 : f32
      %70 = arith.mulf %69, %cst_42 : f32
      %71 = arith.subf %58, %70 : f32
      %72 = arith.mulf %48, %48 : f32
      %cst_43 = arith.constant 4.8828125E-4 : f32
      %73 = arith.mulf %72, %cst_43 : f32
      %74 = arith.subf %63, %73 : f32
      %cst_44 = arith.constant 0.000000e+00 : f32
      %75 = arith.maximumf %74, %cst_44 : f32
      %76 = arith.mulf %53, %53 : f32
      %cst_45 = arith.constant 4.8828125E-4 : f32
      %77 = arith.mulf %76, %cst_45 : f32
      %78 = arith.subf %68, %77 : f32
      %cst_46 = arith.constant 0.000000e+00 : f32
      %79 = arith.maximumf %78, %cst_46 : f32
      %80 = math.sqrt %75 : f32
      %81 = math.sqrt %79 : f32
      %82 = arith.mulf %80, %81 : f32
      %83 = arith.divf %71, %82 : f32
      %c0_47 = arith.constant 0 : index
      %c0_48 = arith.constant 0 : index
      %84 = memref.load %arg3[%c0_47, %c0_48] : memref<1x1xf32, #tpu.memory_space<smem>>
      memref.store %83, %arg3[%c0_47, %c0_48] : memref<1x1xf32, #tpu.memory_space<smem>>
    } else {
    }
    return
  }
  func.func @transform_0(%arg0: i32) -> (i32, i32) {
    %c0_i32 = arith.constant 0 : i32
    %c0_i32_0 = arith.constant 0 : i32
    return %arg0, %c0_i32 : i32, i32
  }
  func.func @transform_1(%arg0: i32) -> (i32, i32) {
    %c0_i32 = arith.constant 0 : i32
    %c0_i32_0 = arith.constant 0 : i32
    return %arg0, %c0_i32 : i32, i32
  }
  func.func @transform_2(%arg0: i32) -> (i32, i32) {
    %c0_i32 = arith.constant 0 : i32
    %c0_i32_0 = arith.constant 0 : i32
    %c0_i32_1 = arith.constant 0 : i32
    return %c0_i32, %c0_i32_0 : i32, i32
  }
}

</mosaic_0001>

<llo_original>
// kernel: cc_loss.1
$region0: #{cc_loss.1}
  #allocation0 [shape = 'u32[]', space=smem, size = 0x4, offset = 0x4, fixed_abs, tag = 'smem constant byte address 0x4 - core index']
  #allocation1 [shape = 'u32[144,128]{1,0:T(1,128)}', space=vmem, size = 0x12000, scoped, tag = 'internal scratch']
  #allocation2 [shape = 'f32[8,128]{1,0:T(8,128)}', space=vmem, size = 0x1000, scoped, tag = 'scratch operand']
  #allocation3 [shape = 'f32[8,128]{1,0:T(8,128)}', space=vmem, size = 0x1000, scoped, tag = 'scratch operand']
  #allocation4 [shape = 'f32[8,128]{1,0:T(8,128)}', space=vmem, size = 0x1000, scoped, tag = 'scratch operand']
  #allocation5 [shape = 'f32[8,128]{1,0:T(8,128)}', space=vmem, size = 0x1000, scoped, tag = 'scratch operand']
  #allocation6 [shape = 'f32[8,128]{1,0:T(8,128)}', space=vmem, size = 0x1000, scoped, tag = 'scratch operand']
  %s0 = inlined_call_operand.vmem [shape: f32[16,128], index: 0, kind: input, shape index: {}]
  %s1 = inlined_call_operand.vmem [shape: f32[16,128], index: 1, kind: input, shape index: {}]
  %s2 = inlined_call_operand.hbm [shape: f32[1,1], index: 2, kind: output, shape index: {}]
  %s3 = sld [smem:[#allocation0]]
  $region26: #{cc_loss.1} parent=0
    _
  %s5 = ssub.s32 1, %s3
  %s6 = scalar_select 0, %s5, %s3
  $region1: #{cc_loss.1} parent=0
    #allocation7 [shape = 'u8[512]{0}', space=smem, size = 0x200, scoped, tag = 'output window, operand 0, single buffered']
    #allocation8 [shape = 's32[1]{0}', space=sflag, size = 0x4, scoped, tag = 'scoped memory for cc_loss.1']
    %7 = vsyncpa [#allocation8], 0
    // Predicated region
    $region2: #{cc_loss.1} parent=1 // pred_check
      _
    $region3: #{cc_loss.1} parent=1 // pred_check_branch
      %9 = sbr.rel (0) target = $region5
    $region4: #{cc_loss.1} parent=1 // pred_region
      _
    $region5: #{cc_loss.1} parent=1 // pred_fallthru
      _
    // Predicated region
    $region6: #{cc_loss.1} parent=1 // pred_check
      _
    $region7: #{cc_loss.1} parent=1 // pred_check_branch
      %11 = sbr.rel (0) target = $region9
    $region8: #{cc_loss.1} parent=1 // pred_region
      _
    $region9: #{cc_loss.1} parent=1 // pred_fallthru
      _
    %p12 = scmp.eq.s32.totalorder 0, 0
    // Predicated region
    $region10: #{cc_loss.1} parent=1 // pred_check
      %p13 = pneg %p12
    $region11: #{cc_loss.1} parent=1 // pred_check_branch
      %15 = sbr.rel (%p13) target = $region13
    $region12: #{cc_loss.1} parent=1 // pred_region
      %16 = vst [vmem:[#allocation2] sm:$0xff] 0.0
      %17 = vst [vmem:[#allocation3] sm:$0xff] 0.0
      %18 = vst [vmem:[#allocation4] sm:$0xff] 0.0
      %19 = vst [vmem:[#allocation5] sm:$0xff] 0.0
      %20 = vst [vmem:[#allocation6] sm:$0xff] 0.0
    $region13: #{cc_loss.1} parent=1 // pred_fallthru
      _
    %v21 = vld [vmem:[#allocation2] sm:$0xff]
    %v22 = vld [vmem:[#allocation3] sm:$0xff]
    %v23 = vld [vmem:[#allocation4] sm:$0xff]
    %v24 = vld [vmem:[#allocation5] sm:$0xff]
    %v25 = vld [vmem:[#allocation6] sm:$0xff]
    %v26 = vld [vmem:[%s0] sm:$0xff]
    %v27 = vld [vmem:[%s1] sm:$0xff]
    %v28 = vadd.f32 %v21, %v26
    %v29 = vadd.f32 %v22, %v27
    %v30 = vmul.f32 %v26, %v27
    %v31 = vadd.f32 %v23, %v30
    %v32 = vmul.f32 %v26, %v26
    %v33 = vadd.f32 %v24, %v32
    %v34 = vmul.f32 %v27, %v27
    %v35 = vadd.f32 %v25, %v34
    %s36 = scalar_lea.vmem %s0, 8
    %v37 = vld [vmem:[%s36] sm:$0xff]
    %s38 = scalar_lea.vmem %s1, 8
    %v39 = vld [vmem:[%s38] sm:$0xff]
    %v40 = vadd.f32 %v28, %v37
    %v41 = vadd.f32 %v29, %v39
    %v42 = vmul.f32 %v37, %v39
    %v43 = vadd.f32 %v31, %v42
    %v44 = vmul.f32 %v37, %v37
    %v45 = vadd.f32 %v33, %v44
    %v46 = vmul.f32 %v39, %v39
    %v47 = vadd.f32 %v35, %v46
    %48 = vst [vmem:[#allocation2] sm:$0xff] %v40
    %49 = vst [vmem:[#allocation3] sm:$0xff] %v41
    %50 = vst [vmem:[#allocation4] sm:$0xff] %v43
    %51 = vst [vmem:[#allocation5] sm:$0xff] %v45
    %52 = vst [vmem:[#allocation6] sm:$0xff] %v47
    // Predicated region
    $region14: #{cc_loss.1} parent=1 // pred_check
      %p53 = pneg %p12
    $region15: #{cc_loss.1} parent=1 // pred_check_branch
      %55 = sbr.rel (%p53) target = $region17
    $region16: #{cc_loss.1} parent=1 // pred_region
      %v56 = vld [vmem:[#allocation2] sm:$0xff]
      %57 = vadd.xlane.f32.xlu0 %v56
      %v58 = vpop.xlane.xlu0 %57
      %v59 = vrot.slane %v58, 4
      %v60 = vadd.f32 %v58, %v59
      %v61 = vrot.slane %v60, 2
      %v62 = vadd.f32 %v60, %v61
      %v63 = vrot.slane %v62, 1
      %v64 = vadd.f32 %v62, %v63
      %s65 = vtos %v64
      %v66 = vld [vmem:[#allocation3] sm:$0xff]
      %67 = vadd.xlane.f32.xlu0 %v66
      %v68 = vpop.xlane.xlu0 %67
      %v69 = vrot.slane %v68, 4
      %v70 = vadd.f32 %v68, %v69
      %v71 = vrot.slane %v70, 2
      %v72 = vadd.f32 %v70, %v71
      %v73 = vrot.slane %v72, 1
      %v74 = vadd.f32 %v72, %v73
      %s75 = vtos %v74
      %v76 = vld [vmem:[#allocation4] sm:$0xff]
      %77 = vadd.xlane.f32.xlu0 %v76
      %v78 = vpop.xlane.xlu0 %77
      %v79 = vrot.slane %v78, 4
      %v80 = vadd.f32 %v78, %v79
      %v81 = vrot.slane %v80, 2
      %v82 = vadd.f32 %v80, %v81
      %v83 = vrot.slane %v82, 1
      %v84 = vadd.f32 %v82, %v83
      %s85 = vtos %v84
      %v86 = vld [vmem:[#allocation5] sm:$0xff]
      %87 = vadd.xlane.f32.xlu0 %v86
      %v88 = vpop.xlane.xlu0 %87
      %v89 = vrot.slane %v88, 4
      %v90 = vadd.f32 %v88, %v89
      %v91 = vrot.slane %v90, 2
      %v92 = vadd.f32 %v90, %v91
      %v93 = vrot.slane %v92, 1
      %v94 = vadd.f32 %v92, %v93
      %s95 = vtos %v94
      %v96 = vld [vmem:[#allocation6] sm:$0xff]
      %97 = vadd.xlane.f32.xlu0 %v96
      %v98 = vpop.xlane.xlu0 %97
      %v99 = vrot.slane %v98, 4
      %v100 = vadd.f32 %v98, %v99
      %v101 = vrot.slane %v100, 2
      %v102 = vadd.f32 %v100, %v101
      %v103 = vrot.slane %v102, 1
      %v104 = vadd.f32 %v102, %v103
      %s105 = vtos %v104
      %s106 = smul.f32 %s65, %s75
      %s107 = smul.f32 %s106, 0.00048828125
      %s108 = ssub.f32 %s85, %s107
      %s109 = smul.f32 %s65, %s65
      %s110 = smul.f32 %s109, 0.00048828125
      %s111 = ssub.f32 %s95, %s110
      %s112 = smax.f32 %s111, 0.0
      %s113 = smul.f32 %s75, %s75
      %s114 = smul.f32 %s113, 0.00048828125
      %s115 = ssub.f32 %s105, %s114
      %s116 = smax.f32 %s115, 0.0
      %v117 = vstv %s112
      %v118 = vrsqrt.pop %v117
      %v119 = vmul.f32 %v117, %v118
      %vm120 = vcmp.eq.f32.partialorder %v117, inf
      %v121 = vsel %vm120, %v117, %v119
      %vm122 = vcmp.eq.f32.partialorder %v117, 0.0
      %v123 = vand.u32 %v117, 2147483648
      %v124 = vsel %vm122, %v123, %v121
      %s125 = vtos %v124
      %v126 = vstv %s116
      %v127 = vrsqrt.pop %v126
      %v128 = vmul.f32 %v126, %v127
      %vm129 = vcmp.eq.f32.partialorder %v126, inf
      %v130 = vsel %vm129, %v126, %v128
      %vm131 = vcmp.eq.f32.partialorder %v126, 0.0
      %v132 = vand.u32 %v126, 2147483648
      %v133 = vsel %vm131, %v132, %v130
      %s134 = vtos %v133
      %s135 = smul.f32 %s125, %s134
      %v136 = vstv %s135
      %v137 = vrcp.pop %v136
      %s138 = vtos %v137
      %s139 = smul.f32 %s108, %s138
      %s140 = scalar_lea.smem [#allocation7], 0
      %141 = sst [smem:[%s140]] %s139
    $region17: #{cc_loss.1} parent=1 // pred_fallthru
      _
    // Predicated region
    $region18: #{cc_loss.1} parent=1 // pred_check
      _
    $region19: #{cc_loss.1} parent=1 // pred_check_branch
      %143 = sbr.rel (0) target = $region21
    $region20: #{cc_loss.1} parent=1 // pred_region
      %s145 = ssub.s32 16, 16
      %146 = vsyncadd [#allocation8], %s145
      %149 = dma.smem_to_hbm [#allocation7], 16, %s2, [#allocation8]
    $region21: #{cc_loss.1} parent=1 // pred_fallthru
      _
    // Predicated region
    $region22: #{cc_loss.1} parent=1 // pred_check
      _
    $region23: #{cc_loss.1} parent=1 // pred_check_branch
      %151 = sbr.rel (0) target = $region25
    $region24: #{cc_loss.1} parent=1 // pred_region
      %152 = dma.done [#allocation8], 16
    $region25: #{cc_loss.1} parent=1 // pred_fallthru
      _
    %153 = sfence
    %154 = vsyncpa [#allocation8], 1

</llo_original>
